<compile_context>
chip_gen: v6e
topology: v6e:2x2x1
jax: 0.10.0
libtpu: 0.0.40
codegen_flags: <defaults>
</compile_context>

<pallas_src>
import math
import functools

import jax
import jax.numpy as jnp
from jax import lax
from jax.experimental import pallas as pl
from jax.experimental.pallas import tpu as pltpu


OUTPUT_DIM = 5          # K (per-sample Normal parameter count)
KP = 128                # single lane-dense output slab width
HALF = 64               # stddev head starts at lane HALF


def _round_up(n, m):
    return ((n + m - 1) // m) * m


# ---------------------------------------------------------------------------
# Kernel
# ---------------------------------------------------------------------------
def _make_kernel(half):
    def kernel(x_ref, prior_ref, w1_ref, b1_ref, w2_ref, b2_ref, out_ref):
        xb = x_ref[...]                                   # [TB, D]  bf16
        pr = prior_ref[...]                               # [TB, 2]  f32
        pm = pr[:, 0:1]                                   # prior means   [TB,1]
        ps = pr[:, 1:2]                                   # prior stddevs [TB,1]

        # lin1 + bias + ReLU (bf16 operands on the MXU, f32 accumulation).
        h = jnp.dot(xb, w1_ref[...], preferred_element_type=jnp.float32)
        h = jnp.maximum(h + b1_ref[...], 0.0)             # [TB, D] f32

        # lin2: both heads packed into ONE 128-lane slab
        # (means @ lanes 0..K-1, stddevs @ lanes half..half+K-1).
        y = jnp.dot(h.astype(jnp.bfloat16), w2_ref[...],
                    preferred_element_type=jnp.float32)
        y = y + b2_ref[...]                               # [TB, KP] f32

        mean_vals = pm + y * ps                           # f32 tail
        std_vals = jnp.logaddexp(y, 0.0) * ps             # softplus, f32 tail

        lane = lax.broadcasted_iota(jnp.int32, y.shape, 1)
        out_ref[...] = jnp.where(lane >= half, std_vals, mean_vals)

    return kernel


# ---------------------------------------------------------------------------
# One-time parameter packing (layout plumbing, done wrapper-side)
# ---------------------------------------------------------------------------
def pack_params(w1, b1, w2, b2, D, K, half=HALF):
    """Pack torch-layout lin1/lin2 params into MXU-friendly matrices.

    w1: [D, D]  (torch [out, in]);  b1: [D]
    w2: [2K, D] (torch [out, in]);  b2: [2K]
    Returns (w1_p [D,D] bf16, b1_p [1,D] f32, w2_p [D,KP] bf16, b2_p [1,KP] f32).
    """
    assert K <= half and half + K <= KP, "heads must fit disjointly in one slab"

    w1_p = jnp.asarray(w1, jnp.float32).T                 # [in, out]
    b1_p = jnp.asarray(b1, jnp.float32).reshape(1, D)

    w2f = jnp.asarray(w2, jnp.float32)                    # [2K, D]
    b2f = jnp.asarray(b2, jnp.float32)
    w2_p = jnp.zeros((D, KP), jnp.float32)
    w2_p = w2_p.at[:, :K].set(w2f[:K].T)                  # means head @ lane 0
    w2_p = w2_p.at[:, half:half + K].set(w2f[K:2 * K].T)  # std head   @ lane half
    b2_p = jnp.zeros((1, KP), jnp.float32)
    b2_p = b2_p.at[0, :K].set(b2f[:K])
    b2_p = b2_p.at[0, half:half + K].set(b2f[K:2 * K])

    return (w1_p.astype(jnp.bfloat16), b1_p,
            w2_p.astype(jnp.bfloat16), b2_p)


# ---------------------------------------------------------------------------
# Pallas call wrapper
# ---------------------------------------------------------------------------
def _choose_tb(B, tile_b):
    """Big tiles for HBM-roofline amortization; >=2 grid steps for large B so
    v7x's second TensorCore gets work via the parallel batch axis."""
    if B <= 16:
        return B                                          # single tile (== full dim)
    tb = min(tile_b, _round_up(-(-B // 2), 8))            # multiple of 8
    return min(tb, B)


def _vmem_budget(tb, D):
    # Each term already includes the x2 double-buffer factor.
    x_bytes = 2 * tb * D * 2                              # bf16 x tile
    pr_bytes = 2 * tb * 2 * 4                             # f32 priors tile
    w_bytes = 2 * (D * D * 2 + D * 4 + D * KP * 2 + KP * 4)   # weights + biases
    out_bytes = 2 * tb * KP * 4                           # f32 output slab tile
    budget = x_bytes + pr_bytes + w_bytes + out_bytes + (8 << 20)  # headroom
    return int(min(max(budget, 8 << 20), 32 << 20))


@functools.partial(jax.jit, static_argnames=("K", "half", "tile_b"))
def proposal_normal_forward(x, prior_means, prior_stddevs,
                            w1_p, b1_p, w2_p, b2_p,
                            *, K, half=HALF, tile_b=1024):
    """Fused ProposalNormal forward. Returns (means [B,K], stddevs [B,K])."""
    B, D = x.shape
    xb = x.astype(jnp.bfloat16)                           # half the x DMA bytes
    priors = jnp.concatenate(
        [jnp.asarray(prior_means, jnp.float32).reshape(B, 1),
         jnp.asarray(prior_stddevs, jnp.float32).reshape(B, 1)], axis=1)

    TB = _choose_tb(B, tile_b)
    grid = (pl.cdiv(B, TB),)

    out = pl.pallas_call(
        _make_kernel(half),
        out_shape=jax.ShapeDtypeStruct((B, KP), jnp.float32),
        grid_spec=pltpu.PrefetchScalarGridSpec(
            num_scalar_prefetch=0,
            grid=grid,
            in_specs=[
                pl.BlockSpec((TB, D), lambda i: (i, 0)),      # x tile (bf16)
                pl.BlockSpec((TB, 2), lambda i: (i, 0)),      # priors (f32)
                pl.BlockSpec((D, D), lambda i: (0, 0)),       # w1 (resident)
                pl.BlockSpec((1, D), lambda i: (0, 0)),       # b1 (resident)
                pl.BlockSpec((D, KP), lambda i: (0, 0)),      # w2 (resident)
                pl.BlockSpec((1, KP), lambda i: (0, 0)),      # b2 (resident)
            ],
            out_specs=pl.BlockSpec((TB, KP), lambda i: (i, 0)),
        ),
        compiler_params=pltpu.CompilerParams(
            dimension_semantics=("parallel",),                # v7x: 2 TCs
            vmem_limit_bytes=_vmem_budget(TB, D),
        ),
    )(xb, priors, w1_p, b1_p, w2_p, b2_p)

    # Unpack the fused lane-dense slab in plain JAX (layout plumbing only).
    means = out[:, :K]
    stddevs = out[:, half:half + K]
    # TODO(synk): torch.distributions.Normal(means, stddevs) is a container
    # object, not tensor compute; the kernel returns its parameter tensors.
    return means, stddevs


# ---------------------------------------------------------------------------
# Deterministic init mirroring the torch module
# ---------------------------------------------------------------------------
def _xavier_uniform(key, fan_out, fan_in, gain):
    bound = gain * math.sqrt(6.0 / (fan_in + fan_out))
    return jax.random.uniform(key, (fan_out, fan_in), jnp.float32, -bound, bound)


def _linear_bias(key, fan_in, fan_out):
    bound = 1.0 / math.sqrt(fan_in)
    return jax.random.uniform(key, (fan_out,), jnp.float32, -bound, bound)


def _check(x, prior_means, prior_stddevs, w1, b1, w2, b2,
           w1_p, b1_p, w2_p, b2_p, D, K):
    means, stddevs = proposal_normal_forward(
        x, prior_means, prior_stddevs, w1_p, b1_p, w2_p, b2_p, K=K)
    jax.block_until_ready((means, stddevs))

    # Reference 1: identical bf16-quantized math in plain JAX (tight).
    xb = x.astype(jnp.bfloat16)
    h_q = jnp.maximum(
        jnp.dot(xb, w1_p, preferred_element_type=jnp.float32) + b1_p, 0.0)
    y_q = jnp.dot(h_q.astype(jnp.bfloat16), w2_p,
                  preferred_element_type=jnp.float32) + b2_p
    means_q = prior_means + y_q[:, :K] * prior_stddevs
    stddevs_q = jax.nn.softplus(y_q[:, HALF:HALF + K]) * prior_stddevs
    assert jnp.allclose(means, means_q, atol=1e-4, rtol=1e-4)
    assert jnp.allclose(stddevs, stddevs_q, atol=1e-4, rtol=1e-4)

    # Reference 2: full-f32 torch semantics (loose; bf16 quantization of MXU path).
    h32 = jnp.maximum(x @ w1.T + b1, 0.0)
    y32 = h32 @ w2.T + b2
    means32 = prior_means + y32[:, :K] * prior_stddevs
    stddevs32 = jax.nn.softplus(y32[:, K:2 * K]) * prior_stddevs
    assert jnp.allclose(means, means32, atol=5e-2, rtol=5e-2)
    assert jnp.allclose(stddevs, stddevs32, atol=5e-2, rtol=5e-2)


if __name__ == "__main__":
    D = 32                # input_dim
    K = OUTPUT_DIM        # output_dim

    key = jax.random.PRNGKey(0)
    kw1, kb1, kw2, kb2 = jax.random.split(key, 4)

    gain_relu = math.sqrt(2.0)
    w1 = _xavier_uniform(kw1, D, D, gain_relu)        # lin1 weight [out,in]
    b1 = _linear_bias(kb1, D, D)
    w2 = _xavier_uniform(kw2, 2 * K, D, 1.0)          # lin2 weight [out,in]
    b2 = _linear_bias(kb2, D, 2 * K)

    # One-time parameter packing.
    w1_p, b1_p, w2_p, b2_p = pack_params(w1, b1, w2, b2, D, K)

    # Case 1: tiny batch (single tile).
    k1 = jax.random.fold_in(key, 1)
    kx, kpm, kps = jax.random.split(k1, 3)
    B = 8
    x = jax.random.normal(kx, (B, D), jnp.float32)
    prior_means = jax.random.normal(kpm, (B, 1), jnp.float32)
    prior_stddevs = jax.random.uniform(kps, (B, 1), jnp.float32, 0.5, 2.0)
    _check(x, prior_means, prior_stddevs, w1, b1, w2, b2,
           w1_p, b1_p, w2_p, b2_p, D, K)

    # Case 2: larger batch exercising the multi-tile (grid >= 2) path.
    k2 = jax.random.fold_in(key, 2)
    kx, kpm, kps = jax.random.split(k2, 3)
    B = 48
    x = jax.random.normal(kx, (B, D), jnp.float32)
    prior_means = jax.random.normal(kpm, (B, 1), jnp.float32)
    prior_stddevs = jax.random.uniform(kps, (B, 1), jnp.float32, 0.5, 2.0)
    _check(x, prior_means, prior_stddevs, w1, b1, w2, b2,
           w1_p, b1_p, w2_p, b2_p, D, K)

    print("KERNEL_OK")
</pallas_src>

<mosaic_0001>
module attributes {stable_mosaic.version = 11 : i64} {
  func.func @kernel(%arg0: i32, %arg1: memref<8x32xbf16, #tpu.memory_space<vmem>>, %arg2: memref<8x2xf32, #tpu.memory_space<vmem>>, %arg3: memref<32x32xbf16, #tpu.memory_space<vmem>>, %arg4: memref<1x32xf32, #tpu.memory_space<vmem>>, %arg5: memref<32x128xbf16, #tpu.memory_space<vmem>>, %arg6: memref<1x128xf32, #tpu.memory_space<vmem>>, %arg7: memref<8x128xf32, #tpu.memory_space<vmem>>) attributes {dimension_semantics = [#tpu.dimension_semantics<parallel>], iteration_bounds = array<i64: 1>, scalar_prefetch = 0 : i64, scratch_operands = 0 : i64, tpu.core_type = #tpu.core_type<tc>, window_params = [{transform_indices = @transform_0, window_bounds = array<i64: 8, 32>}, {transform_indices = @transform_1, window_bounds = array<i64: 8, 2>}, {pipeline_mode = #tpu.pipeline_mode<synchronous>, transform_indices = @transform_2, window_bounds = array<i64: 32, 32>}, {pipeline_mode = #tpu.pipeline_mode<synchronous>, transform_indices = @transform_3, window_bounds = array<i64: 1, 32>}, {pipeline_mode = #tpu.pipeline_mode<synchronous>, transform_indices = @transform_4, window_bounds = array<i64: 32, 128>}, {pipeline_mode = #tpu.pipeline_mode<synchronous>, transform_indices = @transform_5, window_bounds = array<i64: 1, 128>}, {transform_indices = @transform_6, window_bounds = array<i64: 8, 128>}]} {
    %c0 = arith.constant 0 : index
    %c0_0 = arith.constant 0 : index
    %0 = vector.load %arg1[%c0, %c0_0] : memref<8x32xbf16, #tpu.memory_space<vmem>>, vector<8x32xbf16>
    %c0_1 = arith.constant 0 : index
    %c0_2 = arith.constant 0 : index
    %1 = vector.load %arg2[%c0_1, %c0_2] : memref<8x2xf32, #tpu.memory_space<vmem>>, vector<8x2xf32>
    %2 = vector.extract_strided_slice %1 {offsets = [0, 0], sizes = [8, 1], strides = [1, 1]} : vector<8x2xf32> to vector<8x1xf32>
    %3 = vector.extract_strided_slice %1 {offsets = [0, 1], sizes = [8, 1], strides = [1, 1]} : vector<8x2xf32> to vector<8x1xf32>
    %c0_3 = arith.constant 0 : index
    %c0_4 = arith.constant 0 : index
    %4 = vector.load %arg3[%c0_3, %c0_4] : memref<32x32xbf16, #tpu.memory_space<vmem>>, vector<32x32xbf16>
    %cst = arith.constant dense<0.000000e+00> : vector<8x32xf32>
    %5 = tpu.matmul %0, %4, %cst {dimension_numbers = #tpu.dot_dimension_numbers<[1], [0], [0], [1], [0, 0, 1, 1], [], []>} : vector<8x32xbf16>, vector<32x32xbf16>, vector<8x32xf32> -> vector<8x32xf32>
    %c0_5 = arith.constant 0 : index
    %c0_6 = arith.constant 0 : index
    %6 = vector.load %arg4[%c0_5, %c0_6] : memref<1x32xf32, #tpu.memory_space<vmem>>, vector<1x32xf32>
    %7 = vector.broadcast %6 : vector<1x32xf32> to vector<8x32xf32>
    %8 = arith.addf %5, %7 : vector<8x32xf32>
    %cst_7 = arith.constant 0.000000e+00 : f32
    %9 = vector.broadcast %cst_7 : f32 to vector<8x32xf32>
    %10 = arith.maximumf %8, %9 : vector<8x32xf32>
    %11 = arith.truncf %10 : vector<8x32xf32> to vector<8x32xbf16>
    %c0_8 = arith.constant 0 : index
    %c0_9 = arith.constant 0 : index
    %12 = vector.load %arg5[%c0_8, %c0_9] : memref<32x128xbf16, #tpu.memory_space<vmem>>, vector<32x128xbf16>
    %cst_10 = arith.constant dense<0.000000e+00> : vector<8x128xf32>
    %13 = tpu.matmul %11, %12, %cst_10 {dimension_numbers = #tpu.dot_dimension_numbers<[1], [0], [0], [1], [0, 0, 1, 1], [], []>} : vector<8x32xbf16>, vector<32x128xbf16>, vector<8x128xf32> -> vector<8x128xf32>
    %c0_11 = arith.constant 0 : index
    %c0_12 = arith.constant 0 : index
    %14 = vector.load %arg6[%c0_11, %c0_12] : memref<1x128xf32, #tpu.memory_space<vmem>>, vector<1x128xf32>
    %15 = vector.broadcast %14 : vector<1x128xf32> to vector<8x128xf32>
    %16 = arith.addf %13, %15 : vector<8x128xf32>
    %17 = vector.broadcast %3 : vector<8x1xf32> to vector<8x128xf32>
    %18 = arith.mulf %16, %17 : vector<8x128xf32>
    %19 = vector.broadcast %2 : vector<8x1xf32> to vector<8x128xf32>
    %20 = arith.addf %19, %18 : vector<8x128xf32>
    %cst_13 = arith.constant 0.000000e+00 : f32
    %21 = vector.broadcast %cst_13 : f32 to vector<8x128xf32>
    %22 = arith.maximumf %16, %21 : vector<8x128xf32>
    %23 = vector.broadcast %cst_13 : f32 to vector<8x128xf32>
    %24 = arith.subf %16, %23 : vector<8x128xf32>
    %25 = arith.cmpf one, %24, %24 : vector<8x128xf32>
    %26 = vector.broadcast %cst_13 : f32 to vector<8x128xf32>
    %27 = arith.addf %16, %26 : vector<8x128xf32>
    %28 = math.absf %24 : vector<8x128xf32>
    %cst_14 = arith.constant 0.000000e+00 : f32
    %29 = vector.broadcast %cst_14 : f32 to vector<8x128xf32>
    %30 = arith.subf %29, %28 : vector<8x128xf32>
    %31 = math.exp %30 : vector<8x128xf32>
    %32 = math.log1p %31 : vector<8x128xf32>
    %33 = arith.addf %22, %32 : vector<8x128xf32>
    %34 = arith.select %25, %27, %33 : vector<8x128xi1>, vector<8x128xf32>
    %35 = vector.broadcast %3 : vector<8x1xf32> to vector<8x128xf32>
    %36 = arith.mulf %34, %35 : vector<8x128xf32>
    %37 = tpu.iota {dimensions = array<i32: 1>} : vector<8x128xi32>
    %c64_i32 = arith.constant 64 : i32
    %38 = vector.broadcast %c64_i32 : i32 to vector<8x128xi32>
    %39 = arith.cmpi sge, %37, %38 : vector<8x128xi32>
    %40 = arith.select %39, %36, %20 : vector<8x128xi1>, vector<8x128xf32>
    %c0_15 = arith.constant 0 : index
    %c0_16 = arith.constant 0 : index
    %41 = vector.load %arg7[%c0_15, %c0_16] : memref<8x128xf32, #tpu.memory_space<vmem>>, vector<8x128xf32>
    tpu.vector_store %arg7[%c0_15, %c0_16], %40 {strides = array<i32>} : memref<8x128xf32, #tpu.memory_space<vmem>>, vector<8x128xf32>,
    return
  }
  func.func @transform_0(%arg0: i32) -> (i32, i32) {
    %c0_i32 = arith.constant 0 : i32
    %c0_i32_0 = arith.constant 0 : i32
    return %arg0, %c0_i32 : i32, i32
  }
  func.func @transform_1(%arg0: i32) -> (i32, i32) {
    %c0_i32 = arith.constant 0 : i32
    %c0_i32_0 = arith.constant 0 : i32
    return %arg0, %c0_i32 : i32, i32
  }
  func.func @transform_2(%arg0: i32) -> (i32, i32) {
    %c0_i32 = arith.constant 0 : i32
    %c0_i32_0 = arith.constant 0 : i32
    %c0_i32_1 = arith.constant 0 : i32
    return %c0_i32, %c0_i32_0 : i32, i32
  }
  func.func @transform_3(%arg0: i32) -> (i32, i32) {
    %c0_i32 = arith.constant 0 : i32
    %c0_i32_0 = arith.constant 0 : i32
    %c0_i32_1 = arith.constant 0 : i32
    return %c0_i32, %c0_i32_0 : i32, i32
  }
  func.func @transform_4(%arg0: i32) -> (i32, i32) {
    %c0_i32 = arith.constant 0 : i32
    %c0_i32_0 = arith.constant 0 : i32
    %c0_i32_1 = arith.constant 0 : i32
    return %c0_i32, %c0_i32_0 : i32, i32
  }
  func.func @transform_5(%arg0: i32) -> (i32, i32) {
    %c0_i32 = arith.constant 0 : i32
    %c0_i32_0 = arith.constant 0 : i32
    %c0_i32_1 = arith.constant 0 : i32
    return %c0_i32, %c0_i32_0 : i32, i32
  }
  func.func @transform_6(%arg0: i32) -> (i32, i32) {
    %c0_i32 = arith.constant 0 : i32
    %c0_i32_0 = arith.constant 0 : i32
    return %arg0, %c0_i32 : i32, i32
  }
}

</mosaic_0001>

<llo_original>
// kernel: proposal_normal_forward.1
$region0: #{proposal_normal_forward.1}
  #allocation0 [shape = 'u32[]', space=smem, size = 0x4, offset = 0x4, fixed_abs, tag = 'smem constant byte address 0x4 - core index']
  #allocation1 [shape = 'u32[144,128]{1,0:T(1,128)}', space=vmem, size = 0x12000, scoped, tag = 'internal scratch']
  %s0 = inlined_call_operand.vmem [shape: bf16[8,32], index: 0, kind: input, shape index: {}]
  %s1 = inlined_call_operand.vmem [shape: f32[8,2], index: 1, kind: input, shape index: {}]
  %s2 = inlined_call_operand.vmem [shape: bf16[32,32], index: 2, kind: input, shape index: {}]
  %s3 = inlined_call_operand.vmem [shape: f32[1,32], index: 3, kind: input, shape index: {}]
  %s4 = inlined_call_operand.vmem [shape: bf16[32,128], index: 4, kind: input, shape index: {}]
  %s5 = inlined_call_operand.vmem [shape: f32[1,128], index: 5, kind: input, shape index: {}]
  %s6 = inlined_call_operand.vmem [shape: f32[8,128], index: 6, kind: output, shape index: {}]
  %s7 = sld [smem:[#allocation0]]
  $region34: #{proposal_normal_forward.1} parent=0
    _
  %s9 = ssub.s32 1, %s7
  %s10 = scalar_select 0, %s9, %s7
  // Predicated region
  $region2: #{proposal_normal_forward.1} parent=0 // pred_check
    _
  $region3: #{proposal_normal_forward.1} parent=0 // pred_check_branch
    %12 = sbr.rel (0) target = $region5
  $region4: #{proposal_normal_forward.1} parent=0 // pred_region
    _
  $region5: #{proposal_normal_forward.1} parent=0 // pred_fallthru
    _
  // Predicated region
  $region6: #{proposal_normal_forward.1} parent=0 // pred_check
    _
  $region7: #{proposal_normal_forward.1} parent=0 // pred_check_branch
    %14 = sbr.rel (0) target = $region9
  $region8: #{proposal_normal_forward.1} parent=0 // pred_region
    _
  $region9: #{proposal_normal_forward.1} parent=0 // pred_fallthru
    _
  // Predicated region
  $region10: #{proposal_normal_forward.1} parent=0 // pred_check
    _
  $region11: #{proposal_normal_forward.1} parent=0 // pred_check_branch
    %16 = sbr.rel (0) target = $region13
  $region12: #{proposal_normal_forward.1} parent=0 // pred_region
    _
  $region13: #{proposal_normal_forward.1} parent=0 // pred_fallthru
    _
  // Predicated region
  $region14: #{proposal_normal_forward.1} parent=0 // pred_check
    _
  $region15: #{proposal_normal_forward.1} parent=0 // pred_check_branch
    %18 = sbr.rel (0) target = $region17
  $region16: #{proposal_normal_forward.1} parent=0 // pred_region
    _
  $region17: #{proposal_normal_forward.1} parent=0 // pred_fallthru
    _
  // Predicated region
  $region18: #{proposal_normal_forward.1} parent=0 // pred_check
    _
  $region19: #{proposal_normal_forward.1} parent=0 // pred_check_branch
    %20 = sbr.rel (0) target = $region21
  $region20: #{proposal_normal_forward.1} parent=0 // pred_region
    _
  $region21: #{proposal_normal_forward.1} parent=0 // pred_fallthru
    _
  // Predicated region
  $region22: #{proposal_normal_forward.1} parent=0 // pred_check
    _
  $region23: #{proposal_normal_forward.1} parent=0 // pred_check_branch
    %22 = sbr.rel (0) target = $region25
  $region24: #{proposal_normal_forward.1} parent=0 // pred_region
    _
  $region25: #{proposal_normal_forward.1} parent=0 // pred_fallthru
    _
  %v24 = vld [vmem:[%s0] sm:$0xf]
  %v25 = vld [vmem:[%s1] sm:$0xff]
  %v26 = vld [vmem:[%s2] sm:$0xf]
  %v27 = vld [vmem:[%s2 + $0x4] sm:$0xf]
  %v28 = vld [vmem:[%s2 + $0x8] sm:$0xf]
  %v29 = vld [vmem:[%s2 + $0xc] sm:$0xf]
  %v30 = vld [vmem:[%s3] sm:$0x1]
  %v32 = vlaneseq
  %v33 = vshrl.u32 %v32, 7
  %v34 = vsub.s32 0, %v33
  %v35 = vrot.slane %v30, %v34
  %v41 = vunpack.c.l.b16 %v26
  %v42 = vunpack.c.l.b16 %v27
  %v43 = vunpack.c.l.b16 %v28
  %v44 = vunpack.c.l.b16 %v29
  %v45 = vpack.c.b16 %v42, %v41
  %v46 = vpack.c.b16 %v44, %v43
  %vm49 = vcmask 261120
  %v51 = vsel %vm49, %v24, 0
  %53 = vmatprep.subr.bf16.mxu0 0
  %54 = vmatpush1.bf16.msra.mxu0 0
  %55 = vmatprep.subr.bf16.mxu0 0
  %56 = vmatpush1.bf16.msra.mxu0 0
  %57 = vmatprep.subr.bf16.mxu0 0
  %58 = vmatpush1.bf16.msra.mxu0 0
  %59 = vmatprep.subr.bf16.mxu0 0
  %60 = vmatpush1.bf16.msra.mxu0 0
  %61 = vmatprep.subr.bf16.mxu0 0
  %62 = vmatpush1.bf16.msra.mxu0 0
  %63 = vmatprep.subr.bf16.mxu0 0
  %64 = vmatpush1.bf16.msra.mxu0 0
  %65 = vmatprep.subr.bf16.mxu0 0
  %66 = vmatpush1.bf16.msra.mxu0 %v46
  %67 = vmatprep.subr.bf16.mxu0 0
  %68 = vmatpush1.bf16.msra.mxu0 %v45
  %69 = vmatprep.subr.bf16.mxu0 0
  %70 = vmatpush2.bf16.msra.mxu0 0
  %71 = vmatprep.subr.bf16.mxu0 0
  %72 = vmatpush2.bf16.msra.mxu0 0
  %73 = vmatprep.subr.bf16.mxu0 0
  %74 = vmatpush2.bf16.msra.mxu0 0
  %75 = vmatprep.subr.bf16.mxu0 0
  %76 = vmatpush2.bf16.msra.mxu0 0
  %77 = vmatprep.subr.bf16.mxu0 0
  %78 = vmatpush2.bf16.msra.mxu0 0
  %79 = vmatprep.subr.bf16.mxu0 0
  %80 = vmatpush2.bf16.msra.mxu0 0
  %81 = vmatprep.subr.bf16.mxu0 0
  %82 = vmatpush2.bf16.msra.mxu0 0
  %83 = vmatprep.subr.bf16.mxu0 0
  %84 = vmatpush2.bf16.msra.mxu0 0
  %85 = vmatprep.mubr.bf16.mxu0 0
  %86 = vmatmul.mubr.bf16.gmra.mxu0 %v51
  %v87 = vpop.f32.mrf.mxu0
  %v88 = vadd.f32 %v35, %v87
  %v89 = vpop.f32.mrf.mxu0
  %v90 = vpop.f32.mrf.mxu0
  %v91 = vpop.f32.mrf.mxu0
  %92 = vdwg.mxu0
  %v93 = vmax.f32 %v88, 0.0
  %v94 = vpack.c.bf16 %v93, %v93
  %v95 = vld [vmem:[%s4] sm:$0xf]
  %v96 = vld [vmem:[%s4 + $0x4] sm:$0xf]
  %v97 = vld [vmem:[%s4 + $0x8] sm:$0xf]
  %v98 = vld [vmem:[%s4 + $0xc] sm:$0xf]
  %v99 = vld [vmem:[%s5] sm:$0x1]
  %v101 = vlaneseq
  %v102 = vshrl.u32 %v101, 7
  %v103 = vsub.s32 0, %v102
  %v104 = vrot.slane %v99, %v103
  %v110 = vunpack.c.l.b16 %v95
  %v111 = vunpack.c.l.b16 %v96
  %v112 = vunpack.c.l.b16 %v97
  %v113 = vunpack.c.l.b16 %v98
  %v114 = vpack.c.b16 %v111, %v110
  %v115 = vpack.c.b16 %v113, %v112
  %v119 = vsel %vm49, %v94, 0
  %121 = vmatprep.subr.bf16.mxu0 0
  %122 = vmatpush1.bf16.msra.mxu0 0
  %123 = vmatprep.subr.bf16.mxu0 0
  %124 = vmatpush1.bf16.msra.mxu0 0
  %125 = vmatprep.subr.bf16.mxu0 0
  %126 = vmatpush1.bf16.msra.mxu0 0
  %127 = vmatprep.subr.bf16.mxu0 0
  %128 = vmatpush1.bf16.msra.mxu0 0
  %129 = vmatprep.subr.bf16.mxu0 0
  %130 = vmatpush1.bf16.msra.mxu0 0
  %131 = vmatprep.subr.bf16.mxu0 0
  %132 = vmatpush1.bf16.msra.mxu0 0
  %133 = vmatprep.subr.bf16.mxu0 0
  %134 = vmatpush1.bf16.msra.mxu0 %v115
  %135 = vmatprep.subr.bf16.mxu0 0
  %136 = vmatpush1.bf16.msra.mxu0 %v114
  %137 = vmatprep.subr.bf16.mxu0 0
  %138 = vmatpush2.bf16.msra.mxu0 0
  %139 = vmatprep.subr.bf16.mxu0 0
  %140 = vmatpush2.bf16.msra.mxu0 0
  %141 = vmatprep.subr.bf16.mxu0 0
  %142 = vmatpush2.bf16.msra.mxu0 0
  %143 = vmatprep.subr.bf16.mxu0 0
  %144 = vmatpush2.bf16.msra.mxu0 0
  %145 = vmatprep.subr.bf16.mxu0 0
  %146 = vmatpush2.bf16.msra.mxu0 0
  %147 = vmatprep.subr.bf16.mxu0 0
  %148 = vmatpush2.bf16.msra.mxu0 0
  %149 = vmatprep.subr.bf16.mxu0 0
  %150 = vmatpush2.bf16.msra.mxu0 0
  %151 = vmatprep.subr.bf16.mxu0 0
  %152 = vmatpush2.bf16.msra.mxu0 0
  %153 = vmatprep.mubr.bf16.mxu0 0
  %154 = vmatmul.mubr.bf16.gmra.mxu0 %v119
  %v155 = vpop.f32.mrf.mxu0
  %v156 = vadd.f32 %v104, %v155
  %v157 = vpop.f32.mrf.mxu0
  %v158 = vpop.f32.mrf.mxu0
  %v159 = vpop.f32.mrf.mxu0
  %160 = vdwg.mxu0
  %162 = vset.pattern.permute.xlu0 1
  %163 = vperm.xlu0 %162, %v25
  %v164 = vpop.permute.xlu0 %163
  %v166 = vmul.f32 %v156, %v164
  %167 = vset.pattern.permute.xlu0 0
  %168 = vperm.xlu0 %167, %v25
  %v169 = vpop.permute.xlu0 %168
  %v171 = vadd.f32 %v169, %v166
  %v172 = vmax.f32 %v156, 0.0
  %vm173 = vcmp.ne.f32.partialorder %v156, %v156
  %v174 = vadd.f32 %v156, 0.0
  %v175 = vand.u32 2147483647, %v156
  %v176 = vsub.f32 0.0, %v175
  %v177 = vmul.f32 %v176, 1.442695
  %v178 = vpow.pop %v177
  %v179 = vadd.f32 %v178, 1.0
  %v180 = vlog2.pop %v179
  %v181 = vmul.f32 %v180, 0.6931472
  %v182 = vmul.f32 -0.5, %v178
  %v183 = vadd.f32 %v182, 1.0
  %v184 = vmul.f32 %v183, %v178
  %v185 = vand.u32 2147483647, %v178
  %vm186 = vcmp.lt.f32.partialorder %v185, 0.0004427343
  %v187 = vsel %vm186, %v184, %v181
  %v188 = vadd.f32 %v172, %v187
  %v189 = vsel %vm173, %v174, %v188
  %v190 = vmul.f32 %v189, %v164
  %v191 = vlaneseq
  %v192 = vand.u32 %v191, 127
  %vm193 = vcmp.ge.s32.totalorder %v192, 64
  %v194 = vsel %vm193, %v190, %v171
  %195 = vst [vmem:[%s6] sm:$0xff] %v194
  // Predicated region
  $region26: #{proposal_normal_forward.1} parent=0 // pred_check
    _
  $region27: #{proposal_normal_forward.1} parent=0 // pred_check_branch
    %197 = sbr.rel (0) target = $region29
  $region28: #{proposal_normal_forward.1} parent=0 // pred_region
    _
  $region29: #{proposal_normal_forward.1} parent=0 // pred_fallthru
    _
  // Predicated region
  $region30: #{proposal_normal_forward.1} parent=0 // pred_check
    _
  $region31: #{proposal_normal_forward.1} parent=0 // pred_check_branch
    %199 = sbr.rel (0) target = $region33
  $region32: #{proposal_normal_forward.1} parent=0 // pred_region
    _
  $region33: #{proposal_normal_forward.1} parent=0 // pred_fallthru
    _

</llo_original>
